<compile_context>
chip_gen: v6e
topology: v6e:2x2x1
jax: 0.10.0
libtpu: 0.0.40
codegen_flags: <defaults>
</compile_context>

<pallas_src>
import functools

import jax
import jax.numpy as jnp
from jax.experimental import pallas as pl
from jax.experimental.pallas import tpu as pltpu


LANE_CANDIDATES = (512, 256, 128)  # lane widths, all multiples of 128 -> unmasked vst
MAX_TILE_ROWS = 2048               # 2048x512 step: ~10 MiB double-buffered working set
SUBLANE_MULT = 32                  # uint8/int8 sublane packing granularity
SMALL_IMAGE_ELEMS = 32 * 1024      # below this, fuse images into one call


def _round_up(x: int, m: int) -> int:
    return ((x + m - 1) // m) * m


def _to_dtype_kernel(x_ref, o_ref, *, scale_factor):
    """Elementwise cast (+ optional scale) on one (tile_rows, LANE) tile."""
    if scale_factor is None:
        # Plain dtype cast (scale=False, or float->float).
        o_ref[...] = x_ref[...].astype(o_ref.dtype)
    else:
        # int -> float with scaling: convert + scale in f32, cast on store.
        # TODO(synk): intermediate is always f32; f64 outputs lose precision (poor TPU fit anyway).
        x = x_ref[...].astype(jnp.float32) * jnp.float32(scale_factor)
        o_ref[...] = x.astype(o_ref.dtype)


def _resolve_scale_factor(in_dtype, out_dtype, scale):
    """Static (Python) resolution of the torchvision to_dtype scaling rule."""
    if not scale:
        return None
    in_is_int = jnp.issubdtype(in_dtype, jnp.integer)
    out_is_int = jnp.issubdtype(out_dtype, jnp.integer)
    if in_is_int and not out_is_int:
        return 1.0 / float(jnp.iinfo(in_dtype).max)
    if in_is_int and out_is_int:
        # TODO(synk): torchvision rescales int->int (e.g. uint8->int16 multiplies by 257).
        raise NotImplementedError("int->int scaled conversion not implemented")
    if (not in_is_int) and out_is_int:
        # TODO(synk): float->int scaled conversion (mul by max + round + clamp) not implemented.
        raise NotImplementedError("float->int scaled conversion not implemented")
    # float -> float with scale=True: plain cast.
    return None


def _convert_2d(x2d, out_dtype, scale_factor):
    """Tiled, lane-dense elementwise convert of a (rows, LANE) view."""
    rows, lane = x2d.shape
    if rows <= 2 * SUBLANE_MULT:
        tile_rows = rows  # block equals full array dim -> always legal
    else:
        # >= 2 grid steps (v7x megacore sharding), multiple of 32 (uint8 sublane
        # packing), capped so the double-buffered working set stays within the
        # default scoped VMEM on every generation (v5e included).
        tile_rows = min(MAX_TILE_ROWS, _round_up(pl.cdiv(rows, 2), SUBLANE_MULT))
    grid = (pl.cdiv(rows, tile_rows),)

    in_bytes = rows * lane * x2d.dtype.itemsize
    out_bytes = rows * lane * jnp.dtype(out_dtype).itemsize
    kernel = functools.partial(_to_dtype_kernel, scale_factor=scale_factor)

    return pl.pallas_call(
        kernel,
        out_shape=jax.ShapeDtypeStruct((rows, lane), out_dtype),
        grid=grid,
        in_specs=[pl.BlockSpec((tile_rows, lane), lambda i: (i, 0))],
        out_specs=pl.BlockSpec((tile_rows, lane), lambda i: (i, 0)),
        compiler_params=pltpu.CompilerParams(
            dimension_semantics=("parallel",),
        ),
        cost_estimate=pl.CostEstimate(
            flops=rows * lane if scale_factor is not None else 0,
            transcendentals=0,
            bytes_accessed=in_bytes + out_bytes,
        ),
    )(x2d)


def _convert_flat(flat, out_dtype, scale_factor):
    """Convert a flat contiguous 1-D array; zero-copy view when size % 128 == 0."""
    n = flat.shape[0]
    lane = next((l for l in LANE_CANDIDATES if n % l == 0), None)
    if lane is not None:
        # Contiguous reshape is a free bitcast: the pallas_call streams the
        # image's own HBM buffer directly, no pad / no slice.
        out2d = _convert_2d(flat.reshape(n // lane, lane), out_dtype, scale_factor)
        return out2d.reshape(n)
    # Fallback for sizes not a multiple of 128: pad to one lane-dense rectangle.
    lane = LANE_CANDIDATES[-1]
    rows = pl.cdiv(n, lane)
    padded = rows * lane
    flat = jnp.pad(flat, (0, padded - n))
    out2d = _convert_2d(flat.reshape(rows, lane), out_dtype, scale_factor)
    return out2d.reshape(padded)[:n]


def to_dtype_image(img, dtype=jnp.float32, scale=True):
    """Pallas equivalent of v2F.to_dtype for a single image (any shape; elementwise)."""
    out_dtype = jnp.dtype(dtype)
    in_dtype = jnp.dtype(img.dtype)
    if in_dtype == out_dtype:
        return img
    scale_factor = _resolve_scale_factor(in_dtype, out_dtype, scale)
    return _convert_flat(img.reshape(img.size), out_dtype, scale_factor).reshape(img.shape)


def to_dtype_list(imgs, dtype=jnp.float32, scale=True):
    """ToDtypeList.forward: apply to_dtype to every image in the list.

    Large images each get a zero-copy per-image pallas_call; tiny images sharing
    an input dtype are fused into a single call to amortize launch overhead.
    """
    out_dtype = jnp.dtype(dtype)
    results = [None] * len(imgs)
    small_groups = {}

    for idx, img in enumerate(imgs):
        in_dtype = jnp.dtype(img.dtype)
        if in_dtype == out_dtype:
            results[idx] = img  # torchvision returns the input unchanged
            continue
        if img.size < SMALL_IMAGE_ELEMS:
            small_groups.setdefault(in_dtype, []).append(idx)
        else:
            scale_factor = _resolve_scale_factor(in_dtype, out_dtype, scale)
            results[idx] = _convert_flat(
                img.reshape(img.size), out_dtype, scale_factor
            ).reshape(img.shape)

    # Tiny images: launch overhead dominates, so fuse each same-dtype group into
    # one call (the concat/slice wrapper copies are negligible at this size).
    for in_dtype, idxs in small_groups.items():
        scale_factor = _resolve_scale_factor(in_dtype, out_dtype, scale)
        flats = [imgs[i].reshape(imgs[i].size) for i in idxs]
        sizes = [int(f.shape[0]) for f in flats]
        flat = flats[0] if len(flats) == 1 else jnp.concatenate(flats)
        out_flat = _convert_flat(flat, out_dtype, scale_factor)
        off = 0
        for i, sz in zip(idxs, sizes):
            results[i] = out_flat[off:off + sz].reshape(imgs[i].shape)
            off += sz

    return results


if __name__ == "__main__":
    key = jax.random.PRNGKey(0)
    k0, k1, k2, k3, k4 = jax.random.split(key, 5)

    def rand_u8(k, shape):
        return jax.random.randint(k, shape, minval=0, maxval=256, dtype=jnp.int32).astype(jnp.uint8)

    imgs = [
        rand_u8(k0, (4, 16, 16)),     # tiny -> fused concat path
        rand_u8(k1, (4, 16, 16)),     # tiny -> fused concat path
        rand_u8(k2, (3, 128, 128)),   # larger -> per-image zero-copy path (ragged last block)
        rand_u8(k3, (3, 5, 7)),       # size not a multiple of 128 -> padded fallback
        jax.random.normal(k4, (4, 16, 16), dtype=jnp.float32),  # same dtype -> passthrough
    ]

    outs = to_dtype_list(imgs, dtype=jnp.float32, scale=True)
    outs = [jax.block_until_ready(o) for o in outs]

    ok = True
    for img, out in zip(imgs, outs):
        if jnp.dtype(img.dtype) == jnp.float32:
            ref = img  # returned unchanged
        else:
            ref = img.astype(jnp.float32) / 255.0
        ok &= out.dtype == jnp.float32
        ok &= out.shape == img.shape
        ok &= bool(jnp.allclose(out, ref, atol=1e-6))

    # Also exercise the scale=False plain-cast path.
    outs_nc = to_dtype_list(imgs[:4], dtype=jnp.float32, scale=False)
    outs_nc = [jax.block_until_ready(o) for o in outs_nc]
    for img, out in zip(imgs[:4], outs_nc):
        ok &= bool(jnp.array_equal(out, img.astype(jnp.float32)))

    # Single-image helper.
    single = jax.block_until_ready(to_dtype_image(imgs[2], dtype=jnp.float32, scale=True))
    ok &= bool(jnp.allclose(single, imgs[2].astype(jnp.float32) / 255.0, atol=1e-6))

    if ok:
        print("KERNEL_OK")
    else:
        print("KERNEL_MISMATCH")
</pallas_src>

<mosaic_0001>
module attributes {stable_mosaic.version = 11 : i64} {
  func.func @_to_dtype_kernel(%arg0: i32, %arg1: memref<64x512xi8, #tpu.memory_space<vmem>>, %arg2: memref<64x512xf32, #tpu.memory_space<vmem>>) attributes {dimension_semantics = [#tpu.dimension_semantics<parallel>], iteration_bounds = array<i64: 2>, scalar_prefetch = 0 : i64, scratch_operands = 0 : i64, tpu.core_type = #tpu.core_type<tc>, window_params = [{transform_indices = @transform_0, window_bounds = array<i64: 64, 512>}, {transform_indices = @transform_1, window_bounds = array<i64: 64, 512>}]} {
    %c0 = arith.constant 0 : index
    %c0_0 = arith.constant 0 : index
    %0 = vector.load %arg1[%c0, %c0_0] : memref<64x512xi8, #tpu.memory_space<vmem>>, vector<64x512xi8>
    %1 = arith.uitofp %0 : vector<64x512xi8> to vector<64x512xf32>
    %cst = arith.constant 0.00392156886 : f32
    %2 = vector.broadcast %cst : f32 to vector<64x512xf32>
    %3 = arith.mulf %1, %2 : vector<64x512xf32>
    %c0_1 = arith.constant 0 : index
    %c0_2 = arith.constant 0 : index
    %4 = vector.load %arg2[%c0_1, %c0_2] : memref<64x512xf32, #tpu.memory_space<vmem>>, vector<64x512xf32>
    tpu.vector_store %arg2[%c0_1, %c0_2], %3 {strides = array<i32>} : memref<64x512xf32, #tpu.memory_space<vmem>>, vector<64x512xf32>,
    return
  }
  func.func @transform_0(%arg0: i32) -> (i32, i32) {
    %c0_i32 = arith.constant 0 : i32
    %c0_i32_0 = arith.constant 0 : i32
    return %arg0, %c0_i32 : i32, i32
  }
  func.func @transform_1(%arg0: i32) -> (i32, i32) {
    %c0_i32 = arith.constant 0 : i32
    %c0_i32_0 = arith.constant 0 : i32
    return %arg0, %c0_i32 : i32, i32
  }
}

</mosaic_0001>

<llo_original>
// kernel: tpu_custom_call.1
$region0: #{tpu_custom_call.1}
  #allocation0 [shape = 'u32[]', space=smem, size = 0x4, offset = 0x4, fixed_abs, tag = 'smem constant byte address 0x4 - core index']
  #allocation1 [shape = 'u32[144,128]{1,0:T(1,128)}', space=vmem, size = 0x12000, scoped, tag = 'internal scratch']
  %s0 = inlined_call_operand.hbm [shape: u8[96,512], index: 0, kind: input, shape index: {}]
  %s1 = inlined_call_operand.hbm [shape: f32[96,512], index: 1, kind: output, shape index: {}]
  %s2 = sld [smem:[#allocation0]]
  $region41: #{tpu_custom_call.1} parent=0
    _
  %s4 = ssub.s32 1, %s2
  %s5 = scalar_select 0, %s4, %s2
  $region1: #{tpu_custom_call.1} parent=0
    #allocation2 [shape = 'u8[65536]{0}', space=vmem, size = 0x10000, scoped, tag = 'input window, operand 0']
    #allocation3 [shape = 's32[2]{0}', space=sflag, size = 0x8, scoped, tag = 'scoped memory for tpu_custom_call.1']
    #allocation4 [shape = 's32[2]{0}', space=sflag, size = 0x8, scoped, tag = 'scoped memory for tpu_custom_call.1']
    #allocation5 [shape = 'u8[262144]{0}', space=vmem, size = 0x40000, scoped, tag = 'output window, operand 0']
    %6 = vsyncpa [#allocation3], 0
    %s7 = scalar_lea.sflag [#allocation3], 1
    %8 = vsyncpa %s7, 0
    %9 = vsyncpa [#allocation4], 0
    %s10 = scalar_lea.sflag [#allocation4], 1
    %11 = vsyncpa %s10, 0
    loop: start=0, step=1, limit=4
    $region2: #{tpu_custom_call.1} parent=1 // loop_pre_header
      _
    $region3: #{tpu_custom_call.1} parent=1 // loop_header
      %s13 = sphi 0, %s17
      %p14 = scmp.ge.s32.totalorder %s13, 4
      %s23 = sphi 0, %s25
      %s26 = sphi 0, %s23
      %s27 = sphi 0, %s26
      %s43 = sphi 0, %s27
      %s49 = sphi 0, %s51
      %s52 = sphi 0, %s49
      %s53 = sphi 0, %s52
      %s69 = sphi 0, %s53
    $region4: #{tpu_custom_call.1} parent=1 // loop_header_branch
      %16 = sbr.rel (%p14) target = $region8
    $region5: #{tpu_custom_call.1} parent=1 // loop_body
      %s18 = ssub.s32 %s13, 1
      %s19 = ssub.s32 %s13, 2
      %s20 = sadd.s32 %s13, 1
      %s21 = ssub.s32 %s13, %s20
      %p22 = scmp.eq.s32.totalorder %s21, 0
      %s24 = sadd.s32 %s23, 1
      %s25 = scalar_select %p22, %s23, %s24
      %p28 = pneg %p22
      %p29 = scmp.eq.s32.totalorder %s13, 1
      %p30 = por %p28, %p29
      %p31 = scmp.ne.s32.totalorder %s23, %s26
      %p32 = scmp.eq.s32.totalorder %s13, 0
      %p33 = por %p31, %p32
      %p34 = scmp.ne.s32.totalorder %s23, %s26
      %p35 = scmp.eq.s32.totalorder %s18, 1
      %p36 = por %p34, %p35
      %p37 = scmp.ne.s32.totalorder %s26, %s27
      %p38 = scmp.eq.s32.totalorder %s18, 0
      %p39 = por %p37, %p38
      %p40 = scmp.ne.s32.totalorder %s26, %s27
      %p41 = scmp.eq.s32.totalorder %s19, 1
      %p42 = por %p40, %p41
      %p44 = scmp.ne.s32.totalorder %s27, %s43
      %p45 = scmp.eq.s32.totalorder %s19, 0
      %p46 = por %p44, %p45
      %s47 = ssub.s32 %s13, %s20
      %p48 = scmp.eq.s32.totalorder %s47, 0
      %s50 = sadd.s32 %s49, 1
      %s51 = scalar_select %p48, %s49, %s50
      %p54 = pneg %p48
      %p55 = scmp.eq.s32.totalorder %s13, 1
      %p56 = por %p54, %p55
      %p57 = scmp.ne.s32.totalorder %s49, %s52
      %p58 = scmp.eq.s32.totalorder %s13, 0
      %p59 = por %p57, %p58
      %p60 = scmp.ne.s32.totalorder %s49, %s52
      %p61 = scmp.eq.s32.totalorder %s18, 1
      %p62 = por %p60, %p61
      %p63 = scmp.ne.s32.totalorder %s52, %s53
      %p64 = scmp.eq.s32.totalorder %s18, 0
      %p65 = por %p63, %p64
      %p66 = scmp.ne.s32.totalorder %s52, %s53
      %p67 = scmp.eq.s32.totalorder %s19, 1
      %p68 = por %p66, %p67
      %p70 = scmp.ne.s32.totalorder %s53, %s69
      %p71 = scmp.eq.s32.totalorder %s19, 0
      %p72 = por %p70, %p71
      %p73 = scmp.le.s32.totalorder 1, %s13
      %p74 = scmp.lt.s32.totalorder %s13, 3
      %p75 = pnand %p73, %p74
      %p76 = pneg %p75
      // Predicated region
      $region9: #{tpu_custom_call.1} parent=5 // pred_check
        _
      $region10: #{tpu_custom_call.1} parent=5 // pred_check_branch
        %78 = sbr.rel (%p75) target = $region12
      $region11: #{tpu_custom_call.1} parent=5 // pred_region
        %s79 = ssub.s32 %s13, 1
      $region12: #{tpu_custom_call.1} parent=5 // pred_fallthru
        _
      %p80 = scmp.lt.s32.totalorder %s13, 2
      // Predicated region
      $region13: #{tpu_custom_call.1} parent=5 // pred_check
        %p81 = pneg %p80
      $region14: #{tpu_custom_call.1} parent=5 // pred_check_branch
        %83 = sbr.rel (%p81) target = $region16
      $region15: #{tpu_custom_call.1} parent=5 // pred_region
        // Predicated region
        $region17: #{tpu_custom_call.1} parent=15 // pred_check
          %p84 = pneg %p33
        $region18: #{tpu_custom_call.1} parent=15 // pred_check_branch
          %86 = sbr.rel (%p84) target = $region20
        $region19: #{tpu_custom_call.1} parent=15 // pred_region
          %s87 = sand.u32 %s23, 1
          %s88 = scalar_lea.sflag [#allocation3], %s87
          %s89 = sand.u32 %s23, 1
          %s90 = smul.addr %s89, 64
          %s91 = scalar_lea.vmem [#allocation2], %s90
          %s92 = smul.u32 2, %s13
          %s93 = ssub.s32 3, %s92
          %p94 = scmp.lt.s32.totalorder %s93, 2
          %s95 = scalar_select %p94, %s93, 2
          %s96 = smul.u32 128, %s95
          %s97 = smul.u32 %s96, 4
          %s99 = ssub.s32 1024, %s97
          %100 = vsyncadd %s88, %s99
          %p101 = scmp.ne.s32.totalorder 0, %s97
          %s102 = smul.addr %s92, 4
          %s103 = smul.addr %s102, 128
          %s104 = scalar_lea.hbm %s0, %s103
          %s105 = smul.u32 32, %s95
          %s106 = sshll.u32 %s91, 4
          %s107 = int_to_ptr.vmem [resolvable:$true] %s106
          %s108 = sshll.u32 %s105, 4
          %112 = dma.hbm_to_vmem [thread:$0]  (%p101), %s104, %s108, %s107, %s88, 512, 512, 32
        $region20: #{tpu_custom_call.1} parent=15 // pred_fallthru
          _
      $region16: #{tpu_custom_call.1} parent=5 // pred_fallthru
        _
      %p113 = scmp.le.s32.totalorder 1, %s13
      %p114 = scmp.lt.s32.totalorder %s13, 3
      %p115 = pnand %p113, %p114
      %p116 = pneg %p115
      // Predicated region
      $region21: #{tpu_custom_call.1} parent=5 // pred_check
        _
      $region22: #{tpu_custom_call.1} parent=5 // pred_check_branch
        %118 = sbr.rel (%p115) target = $region24
      $region23: #{tpu_custom_call.1} parent=5 // pred_region
        %s119 = ssub.s32 %s13, 1
        %s120 = sand.u32 %s26, 1
        %s121 = scalar_lea.sflag [#allocation3], %s120
        %s122 = sand.u32 %s26, 1
        %s123 = smul.addr %s122, 64
        %s124 = scalar_lea.vmem [#allocation2], %s123
        // Predicated region
        $region25: #{tpu_custom_call.1} parent=23 // pred_check
          %p125 = pneg %p39
        $region26: #{tpu_custom_call.1} parent=23 // pred_check_branch
          %127 = sbr.rel (%p125) target = $region28
        $region27: #{tpu_custom_call.1} parent=23 // pred_region
          %128 = dma.done %s121, 1024
        $region28: #{tpu_custom_call.1} parent=23 // pred_fallthru
          _
        %s129 = sand.u32 %s26, 1
        %s130 = scalar_lea.sflag [#allocation3], %s129
        %s131 = sand.u32 %s26, 1
        %s132 = smul.addr %s131, 64
        %s133 = scalar_lea.vmem [#allocation2], %s132
        %p134 = pneg %p39
        %p135 = pneg %p36
        %p136 = pneg %p65
        %p137 = pneg %p62
        %s138 = sand.u32 %s52, 1
        %s139 = scalar_lea.sflag [#allocation4], %s138
        %s140 = sand.u32 %s52, 1
        %s141 = smul.addr %s140, 256
        %s142 = scalar_lea.vmem [#allocation5], %s141
        %s143 = smul.u32 2, %s18
        %s144 = ssub.s32 3, %s143
        %p145 = scmp.lt.s32.totalorder %s144, 2
        %s146 = scalar_select %p145, %s144, 2
        %s147 = smul.u32 128, %s146
        %s148 = smul.u32 %s147, 4
        %s149 = smul.u32 8, %s18
        %s150 = ssub.s32 12, %s149
        %p151 = scmp.lt.s32.totalorder %s150, 8
        %s152 = scalar_select %p151, %s150, 8
        %s153 = smul.u32 128, %s152
        %s154 = smul.u32 %s153, 4
        %v155 = vld [vmem:[%s124] sm:$0xff]
        %v156 = vld [vmem:[%s124 + $0x8] sm:$0xff]
        %v157 = vld [vmem:[%s124 + $0x10] sm:$0xff]
        %v158 = vld [vmem:[%s124 + $0x18] sm:$0xff]
        %v159 = vld [vmem:[%s124 + $0x20] sm:$0xff]
        %v160 = vld [vmem:[%s124 + $0x28] sm:$0xff]
        %v161 = vld [vmem:[%s124 + $0x30] sm:$0xff]
        %v162 = vld [vmem:[%s124 + $0x38] sm:$0xff]
        %v163 = vunpack.c.0.s8 %v155
        %v164 = vunpack.c.0.s8 %v156
        %v165 = vunpack.c.0.s8 %v157
        %v166 = vunpack.c.0.s8 %v158
        %v167 = vunpack.c.1.s8 %v155
        %v168 = vunpack.c.1.s8 %v156
        %v169 = vunpack.c.1.s8 %v157
        %v170 = vunpack.c.1.s8 %v158
        %v171 = vunpack.c.2.s8 %v155
        %v172 = vunpack.c.2.s8 %v156
        %v173 = vunpack.c.2.s8 %v157
        %v174 = vunpack.c.2.s8 %v158
        %v175 = vunpack.c.3.s8 %v155
        %v176 = vunpack.c.3.s8 %v156
        %v177 = vunpack.c.3.s8 %v157
        %v178 = vunpack.c.3.s8 %v158
        %v179 = vunpack.c.0.s8 %v159
        %v180 = vunpack.c.0.s8 %v160
        %v181 = vunpack.c.0.s8 %v161
        %v182 = vunpack.c.0.s8 %v162
        %v183 = vunpack.c.1.s8 %v159
        %v184 = vunpack.c.1.s8 %v160
        %v185 = vunpack.c.1.s8 %v161
        %v186 = vunpack.c.1.s8 %v162
        %v187 = vunpack.c.2.s8 %v159
        %v188 = vunpack.c.2.s8 %v160
        %v189 = vunpack.c.2.s8 %v161
        %v190 = vunpack.c.2.s8 %v162
        %v191 = vunpack.c.3.s8 %v159
        %v192 = vunpack.c.3.s8 %v160
        %v193 = vunpack.c.3.s8 %v161
        %v194 = vunpack.c.3.s8 %v162
        %v195 = vand.u32 %v163, 255
        %v196 = vand.u32 %v164, 255
        %v197 = vand.u32 %v165, 255
        %v198 = vand.u32 %v166, 255
        %v199 = vand.u32 %v167, 255
        %v200 = vand.u32 %v168, 255
        %v201 = vand.u32 %v169, 255
        %v202 = vand.u32 %v170, 255
        %v203 = vand.u32 %v171, 255
        %v204 = vand.u32 %v172, 255
        %v205 = vand.u32 %v173, 255
        %v206 = vand.u32 %v174, 255
        %v207 = vand.u32 %v175, 255
        %v208 = vand.u32 %v176, 255
        %v209 = vand.u32 %v177, 255
        %v210 = vand.u32 %v178, 255
        %v211 = vand.u32 %v179, 255
        %v212 = vand.u32 %v180, 255
        %v213 = vand.u32 %v181, 255
        %v214 = vand.u32 %v182, 255
        %v215 = vand.u32 %v183, 255
        %v216 = vand.u32 %v184, 255
        %v217 = vand.u32 %v185, 255
        %v218 = vand.u32 %v186, 255
        %v219 = vand.u32 %v187, 255
        %v220 = vand.u32 %v188, 255
        %v221 = vand.u32 %v189, 255
        %v222 = vand.u32 %v190, 255
        %v223 = vand.u32 %v191, 255
        %v224 = vand.u32 %v192, 255
        %v225 = vand.u32 %v193, 255
        %v226 = vand.u32 %v194, 255
        %v227 = vcvt.s32.f32 %v195
        %v228 = vcvt.s32.f32 %v196
        %v229 = vcvt.s32.f32 %v197
        %v230 = vcvt.s32.f32 %v198
        %v231 = vcvt.s32.f32 %v199
        %v232 = vcvt.s32.f32 %v200
        %v233 = vcvt.s32.f32 %v201
        %v234 = vcvt.s32.f32 %v202
        %v235 = vcvt.s32.f32 %v203
        %v236 = vcvt.s32.f32 %v204
        %v237 = vcvt.s32.f32 %v205
        %v238 = vcvt.s32.f32 %v206
        %v239 = vcvt.s32.f32 %v207
        %v240 = vcvt.s32.f32 %v208
        %v241 = vcvt.s32.f32 %v209
        %v242 = vcvt.s32.f32 %v210
        %v243 = vcvt.s32.f32 %v211
        %v244 = vcvt.s32.f32 %v212
        %v245 = vcvt.s32.f32 %v213
        %v246 = vcvt.s32.f32 %v214
        %v247 = vcvt.s32.f32 %v215
        %v248 = vcvt.s32.f32 %v216
        %v249 = vcvt.s32.f32 %v217
        %v250 = vcvt.s32.f32 %v218
        %v251 = vcvt.s32.f32 %v219
        %v252 = vcvt.s32.f32 %v220
        %v253 = vcvt.s32.f32 %v221
        %v254 = vcvt.s32.f32 %v222
        %v255 = vcvt.s32.f32 %v223
        %v256 = vcvt.s32.f32 %v224
        %v257 = vcvt.s32.f32 %v225
        %v258 = vcvt.s32.f32 %v226
        %v259 = vmul.f32 %v227, 0.003921569
        %v260 = vmul.f32 %v228, 0.003921569
        %v261 = vmul.f32 %v229, 0.003921569
        %v262 = vmul.f32 %v230, 0.003921569
        %v263 = vmul.f32 %v231, 0.003921569
        %v264 = vmul.f32 %v232, 0.003921569
        %v265 = vmul.f32 %v233, 0.003921569
        %v266 = vmul.f32 %v234, 0.003921569
        %v267 = vmul.f32 %v235, 0.003921569
        %v268 = vmul.f32 %v236, 0.003921569
        %v269 = vmul.f32 %v237, 0.003921569
        %v270 = vmul.f32 %v238, 0.003921569
        %v271 = vmul.f32 %v239, 0.003921569
        %v272 = vmul.f32 %v240, 0.003921569
        %v273 = vmul.f32 %v241, 0.003921569
        %v274 = vmul.f32 %v242, 0.003921569
        %v275 = vmul.f32 %v243, 0.003921569
        %v276 = vmul.f32 %v244, 0.003921569
        %v277 = vmul.f32 %v245, 0.003921569
        %v278 = vmul.f32 %v246, 0.003921569
        %v279 = vmul.f32 %v247, 0.003921569
        %v280 = vmul.f32 %v248, 0.003921569
        %v281 = vmul.f32 %v249, 0.003921569
        %v282 = vmul.f32 %v250, 0.003921569
        %v283 = vmul.f32 %v251, 0.003921569
        %v284 = vmul.f32 %v252, 0.003921569
        %v285 = vmul.f32 %v253, 0.003921569
        %v286 = vmul.f32 %v254, 0.003921569
        %v287 = vmul.f32 %v255, 0.003921569
        %v288 = vmul.f32 %v256, 0.003921569
        %v289 = vmul.f32 %v257, 0.003921569
        %v290 = vmul.f32 %v258, 0.003921569
        %291 = vst [vmem:[%s142] sm:$0xff] %v259
        %292 = vst [vmem:[%s142 + $0x8] sm:$0xff] %v260
        %293 = vst [vmem:[%s142 + $0x10] sm:$0xff] %v261
        %294 = vst [vmem:[%s142 + $0x18] sm:$0xff] %v262
        %295 = vst [vmem:[%s142 + $0x20] sm:$0xff] %v263
        %296 = vst [vmem:[%s142 + $0x28] sm:$0xff] %v264
        %297 = vst [vmem:[%s142 + $0x30] sm:$0xff] %v265
        %298 = vst [vmem:[%s142 + $0x38] sm:$0xff] %v266
        %299 = vst [vmem:[%s142 + $0x40] sm:$0xff] %v267
        %300 = vst [vmem:[%s142 + $0x48] sm:$0xff] %v268
        %301 = vst [vmem:[%s142 + $0x50] sm:$0xff] %v269
        %302 = vst [vmem:[%s142 + $0x58] sm:$0xff] %v270
        %303 = vst [vmem:[%s142 + $0x60] sm:$0xff] %v271
        %304 = vst [vmem:[%s142 + $0x68] sm:$0xff] %v272
        %305 = vst [vmem:[%s142 + $0x70] sm:$0xff] %v273
        %306 = vst [vmem:[%s142 + $0x78] sm:$0xff] %v274
        %307 = vst [vmem:[%s142 + $0x80] sm:$0xff] %v275
        %308 = vst [vmem:[%s142 + $0x88] sm:$0xff] %v276
        %309 = vst [vmem:[%s142 + $0x90] sm:$0xff] %v277
        %310 = vst [vmem:[%s142 + $0x98] sm:$0xff] %v278
        %311 = vst [vmem:[%s142 + $0xa0] sm:$0xff] %v279
        %312 = vst [vmem:[%s142 + $0xa8] sm:$0xff] %v280
        %313 = vst [vmem:[%s142 + $0xb0] sm:$0xff] %v281
        %314 = vst [vmem:[%s142 + $0xb8] sm:$0xff] %v282
        %315 = vst [vmem:[%s142 + $0xc0] sm:$0xff] %v283
        %316 = vst [vmem:[%s142 + $0xc8] sm:$0xff] %v284
        %317 = vst [vmem:[%s142 + $0xd0] sm:$0xff] %v285
        %318 = vst [vmem:[%s142 + $0xd8] sm:$0xff] %v286
        %319 = vst [vmem:[%s142 + $0xe0] sm:$0xff] %v287
        %320 = vst [vmem:[%s142 + $0xe8] sm:$0xff] %v288
        %321 = vst [vmem:[%s142 + $0xf0] sm:$0xff] %v289
        %322 = vst [vmem:[%s142 + $0xf8] sm:$0xff] %v290
        %s323 = sand.u32 %s52, 1
        %s324 = scalar_lea.sflag [#allocation4], %s323
        %s325 = sand.u32 %s52, 1
        %s326 = smul.addr %s325, 256
        %s327 = scalar_lea.vmem [#allocation5], %s326
        // Predicated region
        $region29: #{tpu_custom_call.1} parent=23 // pred_check
          %p328 = pneg %p62
        $region30: #{tpu_custom_call.1} parent=23 // pred_check_branch
          %330 = sbr.rel (%p328) target = $region32
        $region31: #{tpu_custom_call.1} parent=23 // pred_region
          %s331 = smul.u32 8, %s18
          %s332 = ssub.s32 12, %s331
          %p333 = scmp.lt.s32.totalorder %s332, 8
          %s334 = scalar_select %p333, %s332, 8
          %s335 = smul.u32 128, %s334
          %s336 = smul.u32 %s335, 4
          %s338 = ssub.s32 4096, %s336
          %339 = vsyncadd %s324, %s338
          %p340 = scmp.ne.s32.totalorder 0, %s336
          %s341 = smul.addr %s331, 4
          %s342 = smul.addr %s341, 128
          %s343 = scalar_lea.hbm %s1, %s342
          %s344 = smul.u32 32, %s334
          %s345 = sshll.u32 %s327, 4
          %s346 = int_to_ptr.vmem [resolvable:$true] %s345
          %s347 = sshll.u32 %s344, 4
          %351 = dma.vmem_to_hbm [thread:$0]  (%p340), %s346, %s347, %s343, %s324, 512, 512, 32
        $region32: #{tpu_custom_call.1} parent=23 // pred_fallthru
          _
      $region24: #{tpu_custom_call.1} parent=5 // pred_fallthru
        _
      %p352 = scmp.le.s32.totalorder 2, %s13
      // Predicated region
      $region33: #{tpu_custom_call.1} parent=5 // pred_check
        %p353 = pneg %p352
      $region34: #{tpu_custom_call.1} parent=5 // pred_check_branch
        %355 = sbr.rel (%p353) target = $region36
      $region35: #{tpu_custom_call.1} parent=5 // pred_region
        %s356 = ssub.s32 %s13, 2
        // Predicated region
        $region37: #{tpu_custom_call.1} parent=35 // pred_check
          %p357 = pneg %p68
        $region38: #{tpu_custom_call.1} parent=35 // pred_check_branch
          %359 = sbr.rel (%p357) target = $region40
        $region39: #{tpu_custom_call.1} parent=35 // pred_region
          %s360 = sand.u32 %s53, 1
          %s361 = scalar_lea.sflag [#allocation4], %s360
          %s362 = sand.u32 %s53, 1
          %s363 = smul.addr %s362, 256
          %s364 = scalar_lea.vmem [#allocation5], %s363
          %365 = dma.done %s361, 4096
        $region40: #{tpu_custom_call.1} parent=35 // pred_fallthru
          _
      $region36: #{tpu_custom_call.1} parent=5 // pred_fallthru
        _
    $region6: #{tpu_custom_call.1} parent=1 // loop_footer
      %s17 = sadd.s32 1, %s13
    $region7: #{tpu_custom_call.1} parent=1 // loop_footer_branch
      %12 = sbr.rel target = $region3
    $region8: #{tpu_custom_call.1} parent=1 // loop_exit
      _
    %366 = vsyncpa [#allocation3], 1
    %s367 = scalar_lea.sflag [#allocation3], 1
    %368 = vsyncpa %s367, 1
    %369 = vsyncpa [#allocation4], 1
    %s370 = scalar_lea.sflag [#allocation4], 1
    %371 = vsyncpa %s370, 1

</llo_original>
